<compile_context>
chip_gen: v7x
topology: tpu7x:2x2x1
jax: 0.10.0
libtpu: 0.0.40
codegen_flags: <defaults>
</compile_context>

<pallas_src>
import jax
import jax.numpy as jnp
from jax.experimental import pallas as pl
from jax.experimental.pallas import tpu as pltpu


def _round_up(x, m):
    return ((x + m - 1) // m) * m


def _make_kernel(kW, stride, W_div, W_out_pad, C_in, C_out_pad, tr):
    SC = stride * C_in

    def kernel(x_ref, w_ref, o_ref):
        # x_ref: (tr, W_div*SC)   w_ref: (kW*C_in, C_out_pad)
        # o_ref: (tr*W_out_pad, C_out_pad)
        x3 = x_ref[...].reshape(tr, W_div, SC)
        taps = []
        for kw in range(kW):                       # kW small & static -> unrolled
            q, r = divmod(kw, stride)
            taps.append(x3[:, q:q + W_out_pad, r * C_in:(r + 1) * C_in])
        a = taps[0] if kW == 1 else jnp.concatenate(taps, axis=-1)
        a2 = a.reshape(tr * W_out_pad, kW * C_in)  # W_out_pad % 8 == 0 -> aligned
        o_ref[...] = jnp.dot(
            a2, w_ref[...], preferred_element_type=jnp.float32
        ).astype(o_ref.dtype)

    return kernel


def conv_1xk_pallas(x, weight, stride=1, *, row_block=None):
    """x: (N, C_in, H, W) f32, weight: (C_out, C_in, 1, kW) f32. VALID, no bias."""
    N, C_in, H, W = x.shape
    C_out, C_in_w, kH, kW = weight.shape
    assert C_in_w == C_in and kH == 1
    S = int(stride)
    H_out = (H - 1) // S + 1                 # kernel height is 1
    W_out = (W - kW) // S + 1
    assert W_out >= 1

    # ---- layout glue (single XLA pass; no im2col replication in HBM) ----
    x_nhwc = jnp.transpose(x, (0, 2, 3, 1))  # (N, H, W, C_in)
    if S > 1:
        x_nhwc = x_nhwc[:, ::S, :, :]        # H stride handled here (kH == 1)
    R = N * H_out

    # geometry: width grouped as (W_div, S*C_in) so every tap is a contiguous slice
    W_out_pad = _round_up(W_out, 8)          # sublane-aligned in-kernel collapse
    W_div = W_out_pad + (kW - 1) // S
    W_need = W_div * S
    W_flat = W_need * C_in

    # small C_out: keep it unpadded (block last dim == full dim) -> minimal HBM bytes
    C_out_pad = _round_up(C_out, 128) if C_out >= 64 else C_out

    x_rows = x_nhwc.reshape(R, W * C_in)     # lane-dense 2-D view
    if W_need > W:
        x_rows = jnp.pad(x_rows, ((0, 0), (0, (W_need - W) * C_in)))
    elif W_need < W:
        x_rows = x_rows[:, :W_flat]

    # weight -> (kW*C_in, C_out_pad); row index = kw*C_in + c (matches the concat)
    w2d = jnp.transpose(weight[:, :, 0, :], (2, 1, 0)).reshape(kW * C_in, C_out)
    if C_out_pad > C_out:
        w2d = jnp.pad(w2d, ((0, 0), (0, C_out_pad - C_out)))

    # ---- generation-aware VMEM budget (v7x: 64 MiB/TC, v5e/v6e: 128 MiB) ----
    try:
        vmem_cap = int(pltpu.get_tpu_info().vmem_capacity_bytes)
    except Exception:
        vmem_cap = 64 * 1024 * 1024          # conservative (v7x) default
    vmem_limit = int(min((vmem_cap * 3) // 4, 96 * 1024 * 1024))
    budget = int(min(vmem_cap // 4, 32 * 1024 * 1024))

    # ---- real (8,128)-tiled footprint per row of tr ----
    lane_x = _round_up(W_flat, 128)
    lane_k = _round_up(kW * C_in, 128)
    lane_o = _round_up(C_out_pad, 128)
    fixed_bytes = 2 * 4 * _round_up(kW * C_in, 8) * lane_o        # weight (x2 buf)
    per_row_bytes = 4 * (2 * lane_x                               # x block x2
                         + 2 * W_out_pad * lane_k                 # im2col A + temps
                         + 3 * W_out_pad * lane_o)                # out x2 + f32 result
    avail = max(budget - fixed_bytes, 8 * per_row_bytes)
    tr_budget = max(8, (avail // per_row_bytes) // 8 * 8)

    if row_block is not None:
        tr = _round_up(max(1, int(row_block)), 8)
    else:
        tr = tr_budget
        # keep both v7x TensorCores busy / amortize pipeline overhead
        if R >= 32:
            tr = min(tr, max(8, _round_up(pl.cdiv(R, 4), 8)))
        elif R >= 16:
            tr = min(tr, max(8, _round_up(pl.cdiv(R, 2), 8)))
        tr = min(tr, 4096)
    tr = max(8, min(tr, _round_up(R, 8)))
    G = pl.cdiv(R, tr)
    R_pad = G * tr
    if R_pad > R:                             # no partial-block reads of garbage
        x_rows = jnp.pad(x_rows, ((0, R_pad - R), (0, 0)))

    kernel = _make_kernel(kW, S, W_div, W_out_pad, C_in, C_out_pad, tr)

    out_flat = pl.pallas_call(
        kernel,
        out_shape=jax.ShapeDtypeStruct((R_pad * W_out_pad, C_out_pad), x.dtype),
        grid_spec=pltpu.PrefetchScalarGridSpec(
            num_scalar_prefetch=0,
            grid=(G,),
            in_specs=[
                pl.BlockSpec((tr, W_flat), lambda i: (i, 0)),
                pl.BlockSpec((kW * C_in, C_out_pad), lambda i: (0, 0)),
            ],
            out_specs=pl.BlockSpec((tr * W_out_pad, C_out_pad), lambda i: (i, 0)),
        ),
        compiler_params=pltpu.CompilerParams(
            dimension_semantics=("parallel",),
            vmem_limit_bytes=vmem_limit,
        ),
        cost_estimate=pl.CostEstimate(
            flops=2 * R_pad * W_out_pad * kW * C_in * C_out_pad,
            transcendentals=0,
            bytes_accessed=4 * (R_pad * W_flat
                                + kW * C_in * C_out_pad
                                + R_pad * W_out_pad * C_out_pad),
        ),
    )(x_rows, w2d)

    out = out_flat.reshape(R_pad, W_out_pad, C_out_pad)[:R, :W_out, :C_out]
    out = out.reshape(N, H_out, W_out, C_out)
    return jnp.transpose(out, (0, 3, 1, 2))   # back to NCHW (PyTorch contract)


class CPallas:
    """Pallas equivalent of PyTorch C: Conv2d(nIn, nOut, (1, kSize), stride, bias=False)."""

    def __init__(self, nIn, nOut, kSize, stride=1, *, key=None):
        if key is None:
            key = jax.random.PRNGKey(0)
        fan_in = nIn * kSize
        bound = 1.0 / jnp.sqrt(jnp.float32(fan_in))
        self.weight = jax.random.uniform(
            key, (nOut, nIn, 1, kSize), jnp.float32, minval=-bound, maxval=bound
        )
        self.stride = stride

    def __call__(self, x):
        return conv_1xk_pallas(x, self.weight, self.stride)


if __name__ == "__main__":
    def ref_conv(x, w, stride):
        return jax.lax.conv_general_dilated(
            x, w, window_strides=(stride, stride), padding="VALID",
            dimension_numbers=("NCHW", "OIHW", "NCHW"),
        )

    root = jax.random.PRNGKey(0)
    k1, k2, k3, k4, k5, k6, k7, k8 = jax.random.split(root, 8)

    # 1) primary small config consistent with the module
    N, nIn, H, W = 2, 4, 16, 16
    nOut, kSize, stride = 8, 3, 1
    x = jax.random.normal(k1, (N, nIn, H, W), jnp.float32)
    mod = CPallas(nIn, nOut, kSize, stride, key=k2)
    y = jax.block_until_ready(mod(x))
    r = ref_conv(x, mod.weight, stride)
    assert y.shape == r.shape, (y.shape, r.shape)
    assert jnp.allclose(y, r, atol=1e-5, rtol=1e-5)

    # 2) odd shapes exercising small (unpadded) C_out, W_out / width padding
    x2 = jax.random.normal(k3, (1, 3, 7, 19), jnp.float32)
    w2 = jax.random.normal(k4, (5, 3, 1, 5), jnp.float32) * 0.1
    y2 = jax.block_until_ready(conv_1xk_pallas(x2, w2, 1))
    r2 = ref_conv(x2, w2, 1)
    assert y2.shape == r2.shape, (y2.shape, r2.shape)
    assert jnp.allclose(y2, r2, atol=1e-5, rtol=1e-5)

    # 3) multi-tile grid with a ragged (zero-padded) row tail
    x3 = jax.random.normal(k5, (1, 4, 20, 16), jnp.float32)
    w3_ = jax.random.normal(k6, (8, 4, 1, 3), jnp.float32) * 0.1
    y3 = jax.block_until_ready(conv_1xk_pallas(x3, w3_, 1, row_block=8))
    r3 = ref_conv(x3, w3_, 1)
    assert y3.shape == r3.shape, (y3.shape, r3.shape)
    assert jnp.allclose(y3, r3, atol=1e-5, rtol=1e-5)

    # 4) stride=2 path (contiguous tap slices via the (W_div, stride*C_in) grouping)
    x4 = jax.random.normal(k7, (1, 4, 9, 11), jnp.float32)
    w4 = jax.random.normal(k8, (6, 4, 1, 3), jnp.float32) * 0.1
    y4 = jax.block_until_ready(conv_1xk_pallas(x4, w4, 2))
    r4 = ref_conv(x4, w4, 2)
    assert y4.shape == r4.shape, (y4.shape, r4.shape)
    assert jnp.allclose(y4, r4, atol=1e-5, rtol=1e-5)

    print("KERNEL_OK")
</pallas_src>

<mosaic_0001>
module attributes {stable_mosaic.version = 11 : i64} {
  func.func @kernel(%arg0: i32, %arg1: memref<8x72xf32, #tpu.memory_space<vmem>>, %arg2: memref<12x8xf32, #tpu.memory_space<vmem>>, %arg3: memref<128x8xf32, #tpu.memory_space<vmem>>) attributes {dimension_semantics = [#tpu.dimension_semantics<parallel>], iteration_bounds = array<i64: 4>, scalar_prefetch = 0 : i64, scratch_operands = 0 : i64, tpu.core_type = #tpu.core_type<tc>, window_params = [{transform_indices = @transform_0, window_bounds = array<i64: 8, 72>}, {pipeline_mode = #tpu.pipeline_mode<synchronous>, transform_indices = @transform_1, window_bounds = array<i64: 12, 8>}, {transform_indices = @transform_2, window_bounds = array<i64: 128, 8>}]} {
    %c0 = arith.constant 0 : index
    %c0_0 = arith.constant 0 : index
    %0 = vector.load %arg1[%c0, %c0_0] : memref<8x72xf32, #tpu.memory_space<vmem>>, vector<8x72xf32>
    %1 = vector.shape_cast %0 : vector<8x72xf32> to vector<8x18x4xf32>
    %2 = vector.extract_strided_slice %1 {offsets = [0, 0, 0], sizes = [8, 16, 4], strides = [1, 1, 1]} : vector<8x18x4xf32> to vector<8x16x4xf32>
    %3 = vector.extract_strided_slice %1 {offsets = [0, 1, 0], sizes = [8, 16, 4], strides = [1, 1, 1]} : vector<8x18x4xf32> to vector<8x16x4xf32>
    %4 = vector.extract_strided_slice %1 {offsets = [0, 2, 0], sizes = [8, 16, 4], strides = [1, 1, 1]} : vector<8x18x4xf32> to vector<8x16x4xf32>
    %5 = tpu.concatenate %2, %3, %4 in 2 : vector<8x16x4xf32>, vector<8x16x4xf32>, vector<8x16x4xf32> -> vector<8x16x12xf32>
    %6 = vector.shape_cast %5 : vector<8x16x12xf32> to vector<128x12xf32>
    %c0_1 = arith.constant 0 : index
    %c0_2 = arith.constant 0 : index
    %7 = vector.load %arg2[%c0_1, %c0_2] : memref<12x8xf32, #tpu.memory_space<vmem>>, vector<12x8xf32>
    %cst = arith.constant dense<0.000000e+00> : vector<128x8xf32>
    %8 = tpu.matmul %6, %7, %cst {dimension_numbers = #tpu.dot_dimension_numbers<[1], [0], [0], [1], [0, 0, 1, 1], [], []>} : vector<128x12xf32>, vector<12x8xf32>, vector<128x8xf32> -> vector<128x8xf32>
    %c0_3 = arith.constant 0 : index
    %c0_4 = arith.constant 0 : index
    %9 = vector.load %arg3[%c0_3, %c0_4] : memref<128x8xf32, #tpu.memory_space<vmem>>, vector<128x8xf32>
    tpu.vector_store %arg3[%c0_3, %c0_4], %8 {strides = array<i32>} : memref<128x8xf32, #tpu.memory_space<vmem>>, vector<128x8xf32>,
    return
  }
  func.func @transform_0(%arg0: i32) -> (i32, i32) {
    %c0_i32 = arith.constant 0 : i32
    %c0_i32_0 = arith.constant 0 : i32
    return %arg0, %c0_i32 : i32, i32
  }
  func.func @transform_1(%arg0: i32) -> (i32, i32) {
    %c0_i32 = arith.constant 0 : i32
    %c0_i32_0 = arith.constant 0 : i32
    %c0_i32_1 = arith.constant 0 : i32
    return %c0_i32, %c0_i32_0 : i32, i32
  }
  func.func @transform_2(%arg0: i32) -> (i32, i32) {
    %c0_i32 = arith.constant 0 : i32
    %c0_i32_0 = arith.constant 0 : i32
    return %arg0, %c0_i32 : i32, i32
  }
}

</mosaic_0001>

<llo_original>
// kernel: tpu_custom_call.1
$region0: #{tpu_custom_call.1}
  #allocation0 [shape = 'u32[]', space=smem, size = 0x4, offset = 0x4, fixed_abs, tag = 'smem constant byte address 0x4 - core index']
  #allocation1 [shape = 'u32[144,128]{1,0:T(1,128)}', space=vmem, size = 0x12000, scoped, tag = 'internal scratch']
  %s0 = inlined_call_operand.hbm [shape: f32[32,72], index: 0, kind: input, shape index: {}]
  %s1 = inlined_call_operand.vmem [shape: f32[12,8], index: 1, kind: input, shape index: {}]
  %s2 = inlined_call_operand.vmem [shape: f32[512,8], index: 2, kind: output, shape index: {}]
  %s3 = sld [smem:[#allocation0]]
  $region45: #{tpu_custom_call.1} parent=0
    _
  %s5 = ssub.s32 1, %s3
  %s6 = scalar_select 0, %s5, %s3
  $region1: #{tpu_custom_call.1} parent=0
    #allocation2 [shape = 'u8[8192]{0}', space=vmem, size = 0x2000, scoped, tag = 'input window, operand 0']
    #allocation3 [shape = 's32[2]{0}', space=sflag, size = 0x8, scoped, tag = 'scoped memory for tpu_custom_call.1']
    %7 = vsyncpa [#allocation3], 0
    %s8 = scalar_lea.sflag [#allocation3], 1
    %9 = vsyncpa %s8, 0
    loop: start=0, step=1, limit=6
    $region2: #{tpu_custom_call.1} parent=1 // loop_pre_header
      _
    $region3: #{tpu_custom_call.1} parent=1 // loop_header
      %s11 = sphi 0, %s15
      %p12 = scmp.ge.s32.totalorder %s11, 6
      %s21 = sphi 0, %s23
      %s24 = sphi 0, %s21
      %s25 = sphi 0, %s24
      %s41 = sphi 0, %s25
      %s45 = sphi 0, %s45
      %s47 = sphi 0, %s45
      %s48 = sphi 0, %s47
      %s62 = sphi 0, %s48
      %s68 = sphi 0, %s70
      %s71 = sphi 0, %s68
      %s72 = sphi 0, %s71
      %s88 = sphi 0, %s72
    $region4: #{tpu_custom_call.1} parent=1 // loop_header_branch
      %14 = sbr.rel (%p12) target = $region8
    $region5: #{tpu_custom_call.1} parent=1 // loop_body
      %s16 = ssub.s32 %s11, 1
      %s17 = ssub.s32 %s11, 2
      %s18 = sadd.s32 %s11, 1
      %s19 = ssub.s32 %s11, %s18
      %p20 = scmp.eq.s32.totalorder %s19, 0
      %s22 = sadd.s32 %s21, 1
      %s23 = scalar_select %p20, %s21, %s22
      %p26 = pneg %p20
      %p27 = scmp.eq.s32.totalorder %s11, 3
      %p28 = por %p26, %p27
      %p29 = scmp.ne.s32.totalorder %s21, %s24
      %p30 = scmp.eq.s32.totalorder %s11, 0
      %p31 = por %p29, %p30
      %p32 = scmp.ne.s32.totalorder %s21, %s24
      %p33 = scmp.eq.s32.totalorder %s16, 3
      %p34 = por %p32, %p33
      %p35 = scmp.ne.s32.totalorder %s24, %s25
      %p36 = scmp.eq.s32.totalorder %s16, 0
      %p37 = por %p35, %p36
      %p38 = scmp.ne.s32.totalorder %s24, %s25
      %p39 = scmp.eq.s32.totalorder %s17, 3
      %p40 = por %p38, %p39
      %p42 = scmp.ne.s32.totalorder %s25, %s41
      %p43 = scmp.eq.s32.totalorder %s17, 0
      %p44 = por %p42, %p43
      %s46 = sadd.s32 %s45, 1
      %p49 = scmp.eq.s32.totalorder %s11, 3
      %p50 = scmp.ne.s32.totalorder %s45, %s47
      %p51 = scmp.eq.s32.totalorder %s11, 0
      %p52 = por %p50, %p51
      %p53 = scmp.ne.s32.totalorder %s45, %s47
      %p54 = scmp.eq.s32.totalorder %s16, 3
      %p55 = por %p53, %p54
      %p56 = scmp.ne.s32.totalorder %s47, %s48
      %p57 = scmp.eq.s32.totalorder %s16, 0
      %p58 = por %p56, %p57
      %p59 = scmp.ne.s32.totalorder %s47, %s48
      %p60 = scmp.eq.s32.totalorder %s17, 3
      %p61 = por %p59, %p60
      %p63 = scmp.ne.s32.totalorder %s48, %s62
      %p64 = scmp.eq.s32.totalorder %s17, 0
      %p65 = por %p63, %p64
      %s66 = ssub.s32 %s11, %s18
      %p67 = scmp.eq.s32.totalorder %s66, 0
      %s69 = sadd.s32 %s68, 1
      %s70 = scalar_select %p67, %s68, %s69
      %p73 = pneg %p67
      %p74 = scmp.eq.s32.totalorder %s11, 3
      %p75 = por %p73, %p74
      %p76 = scmp.ne.s32.totalorder %s68, %s71
      %p77 = scmp.eq.s32.totalorder %s11, 0
      %p78 = por %p76, %p77
      %p79 = scmp.ne.s32.totalorder %s68, %s71
      %p80 = scmp.eq.s32.totalorder %s16, 3
      %p81 = por %p79, %p80
      %p82 = scmp.ne.s32.totalorder %s71, %s72
      %p83 = scmp.eq.s32.totalorder %s16, 0
      %p84 = por %p82, %p83
      %p85 = scmp.ne.s32.totalorder %s71, %s72
      %p86 = scmp.eq.s32.totalorder %s17, 3
      %p87 = por %p85, %p86
      %p89 = scmp.ne.s32.totalorder %s72, %s88
      %p90 = scmp.eq.s32.totalorder %s17, 0
      %p91 = por %p89, %p90
      %p92 = scmp.le.s32.totalorder 1, %s11
      %p93 = scmp.lt.s32.totalorder %s11, 5
      %p94 = pnand %p92, %p93
      %p95 = pneg %p94
      // Predicated region
      $region9: #{tpu_custom_call.1} parent=5 // pred_check
        _
      $region10: #{tpu_custom_call.1} parent=5 // pred_check_branch
        %97 = sbr.rel (%p94) target = $region12
      $region11: #{tpu_custom_call.1} parent=5 // pred_region
        %s98 = ssub.s32 %s11, 1
        // Predicated region
        $region13: #{tpu_custom_call.1} parent=11 // pred_check
          %p99 = pneg %p58
        $region14: #{tpu_custom_call.1} parent=11 // pred_check_branch
          %101 = sbr.rel (%p99) target = $region16
        $region15: #{tpu_custom_call.1} parent=11 // pred_region
          _
        $region16: #{tpu_custom_call.1} parent=11 // pred_fallthru
          _
      $region12: #{tpu_custom_call.1} parent=5 // pred_fallthru
        _
      %p102 = scmp.lt.s32.totalorder %s11, 4
      // Predicated region
      $region17: #{tpu_custom_call.1} parent=5 // pred_check
        %p103 = pneg %p102
      $region18: #{tpu_custom_call.1} parent=5 // pred_check_branch
        %105 = sbr.rel (%p103) target = $region20
      $region19: #{tpu_custom_call.1} parent=5 // pred_region
        // Predicated region
        $region21: #{tpu_custom_call.1} parent=19 // pred_check
          %p106 = pneg %p31
        $region22: #{tpu_custom_call.1} parent=19 // pred_check_branch
          %108 = sbr.rel (%p106) target = $region24
        $region23: #{tpu_custom_call.1} parent=19 // pred_region
          %s109 = sand.u32 %s21, 1
          %s110 = scalar_lea.sflag [#allocation3], %s109
          %s111 = sand.u32 %s21, 1
          %s112 = smul.addr %s111, 8
          %s113 = scalar_lea.vmem [#allocation2], %s112
          %s115 = ssub.s32 128, 128
          %116 = vsyncadd %s110, %s115
          %s117 = smul.addr %s11, 128
          %s118 = scalar_lea.hbm %s0, %s117
          %s120 = sshll.u32 %s113, 4
          %s121 = int_to_ptr.vmem [resolvable:$true] %s120
          %123 = dma.hbm_to_vmem [thread:$0]  %s118, 128, %s121, %s110
        $region24: #{tpu_custom_call.1} parent=19 // pred_fallthru
          _
      $region20: #{tpu_custom_call.1} parent=5 // pred_fallthru
        _
      %p124 = scmp.le.s32.totalorder 1, %s11
      %p125 = scmp.lt.s32.totalorder %s11, 5
      %p126 = pnand %p124, %p125
      %p127 = pneg %p126
      // Predicated region
      $region25: #{tpu_custom_call.1} parent=5 // pred_check
        _
      $region26: #{tpu_custom_call.1} parent=5 // pred_check_branch
        %129 = sbr.rel (%p126) target = $region28
      $region27: #{tpu_custom_call.1} parent=5 // pred_region
        %s130 = ssub.s32 %s11, 1
        %s131 = sand.u32 %s24, 1
        %s132 = scalar_lea.sflag [#allocation3], %s131
        %s133 = sand.u32 %s24, 1
        %s134 = smul.addr %s133, 8
        %s135 = scalar_lea.vmem [#allocation2], %s134
        // Predicated region
        $region29: #{tpu_custom_call.1} parent=27 // pred_check
          %p136 = pneg %p37
        $region30: #{tpu_custom_call.1} parent=27 // pred_check_branch
          %138 = sbr.rel (%p136) target = $region32
        $region31: #{tpu_custom_call.1} parent=27 // pred_region
          %139 = dma.done %s132, 128
        $region32: #{tpu_custom_call.1} parent=27 // pred_fallthru
          _
        %s140 = sand.u32 %s24, 1
        %s141 = scalar_lea.sflag [#allocation3], %s140
        %s142 = sand.u32 %s24, 1
        %s143 = smul.addr %s142, 8
        %s144 = scalar_lea.vmem [#allocation2], %s143
        %p145 = pneg %p37
        %p146 = pneg %p34
        %p147 = pneg %p58
        %p148 = pneg %p55
        %p149 = pneg %p84
        %p150 = pneg %p81
        %s151 = smul.u32 16, %s16
        %p152 = scmp.lt.s32.totalorder %s151, 63
        %s153 = scalar_select %p152, %s151, 63
        %s154 = smul.addr %s153, 8
        %s155 = scalar_lea.vmem %s2, %s154
        %s156 = smul.u32 16, %s16
        %p157 = scmp.lt.s32.totalorder %s156, 63
        %s158 = scalar_select %p157, %s156, 63
        %s159 = smul.addr %s158, 8
        %s160 = scalar_lea.vmem %s2, %s159
        %s161 = smul.u32 16, %s16
        %v162 = vld [vmem:[%s135] sm:$0xff]
        %164 = vrot.lane.b32.xlu0 %v162, 124
        %v165 = vpop.permute.xlu0 %164
        %167 = vrot.lane.b32.xlu0 %v162, 120
        %v168 = vpop.permute.xlu0 %167
        %170 = vrot.lane.b32.xlu0 %v162, 116
        %v171 = vpop.permute.xlu0 %170
        %173 = vrot.lane.b32.xlu0 %v162, 112
        %v174 = vpop.permute.xlu0 %173
        %176 = vrot.lane.b32.xlu0 %v162, 108
        %v177 = vpop.permute.xlu0 %176
        %179 = vrot.lane.b32.xlu0 %v162, 104
        %v180 = vpop.permute.xlu0 %179
        %182 = vrot.lane.b32.xlu0 %v162, 100
        %v183 = vpop.permute.xlu0 %182
        %185 = vrot.lane.b32.xlu0 %v162, 96
        %v186 = vpop.permute.xlu0 %185
        %188 = vrot.lane.b32.xlu0 %v162, 92
        %v189 = vpop.permute.xlu0 %188
        %191 = vrot.lane.b32.xlu0 %v162, 88
        %v192 = vpop.permute.xlu0 %191
        %194 = vrot.lane.b32.xlu0 %v162, 84
        %v195 = vpop.permute.xlu0 %194
        %197 = vrot.lane.b32.xlu0 %v162, 80
        %v198 = vpop.permute.xlu0 %197
        %200 = vrot.lane.b32.xlu0 %v162, 76
        %v201 = vpop.permute.xlu0 %200
        %203 = vrot.lane.b32.xlu0 %v162, 72
        %v204 = vpop.permute.xlu0 %203
        %206 = vrot.lane.b32.xlu0 %v162, 68
        %v207 = vpop.permute.xlu0 %206
        %209 = vrot.lane.b32.xlu0 %v162, 64
        %v210 = vpop.permute.xlu0 %209
        %212 = vrot.lane.b32.xlu0 %v162, 60
        %v213 = vpop.permute.xlu0 %212
        %v215 = vcombine.low %v162, %v168
        %v216 = vcombine.high %v162, %v168
        %v218 = vunpack.c.l.s4 1983009808
        %v219 = vunpack.c.0.s8 %v218
        %v220 = vlaneseq
        %v221 = vshrl.u32 %v220, 7
        %v222 = vsub.s32 %v219, %v221
        %v223 = vrot.slane %v215, %v222
        %v225 = vunpack.c.l.s4 1983009808
        %v226 = vunpack.c.0.s8 %v225
        %v227 = vlaneseq
        %v228 = vshrl.u32 %v227, 7
        %v229 = vsub.s32 %v226, %v228
        %v230 = vrot.slane %v216, %v229
        %v231 = vcombine.low %v165, %v171
        %v232 = vcombine.high %v165, %v171
        %v234 = vunpack.c.l.s4 1983009808
        %v235 = vunpack.c.0.s8 %v234
        %v236 = vlaneseq
        %v237 = vshrl.u32 %v236, 7
        %v238 = vsub.s32 %v235, %v237
        %v239 = vrot.slane %v231, %v238
        %v241 = vunpack.c.l.s4 1983009808
        %v242 = vunpack.c.0.s8 %v241
        %v243 = vlaneseq
        %v244 = vshrl.u32 %v243, 7
        %v245 = vsub.s32 %v242, %v244
        %v246 = vrot.slane %v232, %v245
        %v247 = vcombine.low %v174, %v180
        %v248 = vcombine.high %v174, %v180
        %v250 = vunpack.c.l.s4 1983009808
        %v251 = vunpack.c.0.s8 %v250
        %v252 = vlaneseq
        %v253 = vshrl.u32 %v252, 7
        %v254 = vsub.s32 %v251, %v253
        %v255 = vrot.slane %v247, %v254
        %v257 = vunpack.c.l.s4 1983009808
        %v258 = vunpack.c.0.s8 %v257
        %v259 = vlaneseq
        %v260 = vshrl.u32 %v259, 7
        %v261 = vsub.s32 %v258, %v260
        %v262 = vrot.slane %v248, %v261
        %v263 = vcombine.low %v177, %v183
        %v264 = vcombine.high %v177, %v183
        %v266 = vunpack.c.l.s4 1983009808
        %v267 = vunpack.c.0.s8 %v266
        %v268 = vlaneseq
        %v269 = vshrl.u32 %v268, 7
        %v270 = vsub.s32 %v267, %v269
        %v271 = vrot.slane %v263, %v270
        %v273 = vunpack.c.l.s4 1983009808
        %v274 = vunpack.c.0.s8 %v273
        %v275 = vlaneseq
        %v276 = vshrl.u32 %v275, 7
        %v277 = vsub.s32 %v274, %v276
        %v278 = vrot.slane %v264, %v277
        %v279 = vcombine.low %v223, %v239
        %v280 = vcombine.high %v223, %v239
        %v282 = vunpack.c.l.s4 1934713408
        %v283 = vunpack.c.0.s8 %v282
        %v284 = vlaneseq
        %v285 = vshrl.u32 %v284, 7
        %v286 = vsub.s32 %v283, %v285
        %v287 = vrot.slane %v279, %v286
        %v289 = vunpack.c.l.s4 1934713408
        %v290 = vunpack.c.0.s8 %v289
        %v291 = vlaneseq
        %v292 = vshrl.u32 %v291, 7
        %v293 = vsub.s32 %v290, %v292
        %v294 = vrot.slane %v280, %v293
        %v295 = vcombine.low %v230, %v246
        %v296 = vcombine.high %v230, %v246
        %v298 = vunpack.c.l.s4 1934713408
        %v299 = vunpack.c.0.s8 %v298
        %v300 = vlaneseq
        %v301 = vshrl.u32 %v300, 7
        %v302 = vsub.s32 %v299, %v301
        %v303 = vrot.slane %v295, %v302
        %v305 = vunpack.c.l.s4 1934713408
        %v306 = vunpack.c.0.s8 %v305
        %v307 = vlaneseq
        %v308 = vshrl.u32 %v307, 7
        %v309 = vsub.s32 %v306, %v308
        %v310 = vrot.slane %v296, %v309
        %v311 = vcombine.low %v255, %v271
        %v312 = vcombine.high %v255, %v271
        %v314 = vunpack.c.l.s4 1934713408
        %v315 = vunpack.c.0.s8 %v314
        %v316 = vlaneseq
        %v317 = vshrl.u32 %v316, 7
        %v318 = vsub.s32 %v315, %v317
        %v319 = vrot.slane %v311, %v318
        %v321 = vunpack.c.l.s4 1934713408
        %v322 = vunpack.c.0.s8 %v321
        %v323 = vlaneseq
        %v324 = vshrl.u32 %v323, 7
        %v325 = vsub.s32 %v322, %v324
        %v326 = vrot.slane %v312, %v325
        %v327 = vcombine.low %v262, %v278
        %v328 = vcombine.high %v262, %v278
        %v330 = vunpack.c.l.s4 1934713408
        %v331 = vunpack.c.0.s8 %v330
        %v332 = vlaneseq
        %v333 = vshrl.u32 %v332, 7
        %v334 = vsub.s32 %v331, %v333
        %v335 = vrot.slane %v327, %v334
        %v337 = vunpack.c.l.s4 1934713408
        %v338 = vunpack.c.0.s8 %v337
        %v339 = vlaneseq
        %v340 = vshrl.u32 %v339, 7
        %v341 = vsub.s32 %v338, %v340
        %v342 = vrot.slane %v328, %v341
        %v343 = vcombine.low %v287, %v319
        %v344 = vcombine.high %v287, %v319
        %v345 = vcombine.low %v294, %v326
        %v346 = vcombine.high %v294, %v326
        %v347 = vcombine.low %v303, %v335
        %v348 = vcombine.high %v303, %v335
        %v349 = vcombine.low %v310, %v342
        %v350 = vcombine.high %v310, %v342
        %v351 = vcombine.low %v186, %v192
        %v352 = vcombine.high %v186, %v192
        %v354 = vunpack.c.l.s4 1983009808
        %v355 = vunpack.c.0.s8 %v354
        %v356 = vlaneseq
        %v357 = vshrl.u32 %v356, 7
        %v358 = vsub.s32 %v355, %v357
        %v359 = vrot.slane %v351, %v358
        %v361 = vunpack.c.l.s4 1983009808
        %v362 = vunpack.c.0.s8 %v361
        %v363 = vlaneseq
        %v364 = vshrl.u32 %v363, 7
        %v365 = vsub.s32 %v362, %v364
        %v366 = vrot.slane %v352, %v365
        %v367 = vcombine.low %v189, %v195
        %v368 = vcombine.high %v189, %v195
        %v370 = vunpack.c.l.s4 1983009808
        %v371 = vunpack.c.0.s8 %v370
        %v372 = vlaneseq
        %v373 = vshrl.u32 %v372, 7
        %v374 = vsub.s32 %v371, %v373
        %v375 = vrot.slane %v367, %v374
        %v377 = vunpack.c.l.s4 1983009808
        %v378 = vunpack.c.0.s8 %v377
        %v379 = vlaneseq
        %v380 = vshrl.u32 %v379, 7
        %v381 = vsub.s32 %v378, %v380
        %v382 = vrot.slane %v368, %v381
        %v383 = vcombine.low %v198, %v204
        %v384 = vcombine.high %v198, %v204
        %v386 = vunpack.c.l.s4 1983009808
        %v387 = vunpack.c.0.s8 %v386
        %v388 = vlaneseq
        %v389 = vshrl.u32 %v388, 7
        %v390 = vsub.s32 %v387, %v389
        %v391 = vrot.slane %v383, %v390
        %v393 = vunpack.c.l.s4 1983009808
        %v394 = vunpack.c.0.s8 %v393
        %v395 = vlaneseq
        %v396 = vshrl.u32 %v395, 7
        %v397 = vsub.s32 %v394, %v396
        %v398 = vrot.slane %v384, %v397
        %v399 = vcombine.low %v201, %v207
        %v400 = vcombine.high %v201, %v207
        %v402 = vunpack.c.l.s4 1983009808
        %v403 = vunpack.c.0.s8 %v402
        %v404 = vlaneseq
        %v405 = vshrl.u32 %v404, 7
        %v406 = vsub.s32 %v403, %v405
        %v407 = vrot.slane %v399, %v406
        %v409 = vunpack.c.l.s4 1983009808
        %v410 = vunpack.c.0.s8 %v409
        %v411 = vlaneseq
        %v412 = vshrl.u32 %v411, 7
        %v413 = vsub.s32 %v410, %v412
        %v414 = vrot.slane %v400, %v413
        %v415 = vcombine.low %v359, %v375
        %v416 = vcombine.high %v359, %v375
        %v418 = vunpack.c.l.s4 1934713408
        %v419 = vunpack.c.0.s8 %v418
        %v420 = vlaneseq
        %v421 = vshrl.u32 %v420, 7
        %v422 = vsub.s32 %v419, %v421
        %v423 = vrot.slane %v415, %v422
        %v425 = vunpack.c.l.s4 1934713408
        %v426 = vunpack.c.0.s8 %v425
        %v427 = vlaneseq
        %v428 = vshrl.u32 %v427, 7
        %v429 = vsub.s32 %v426, %v428
        %v430 = vrot.slane %v416, %v429
        %v431 = vcombine.low %v366, %v382
        %v432 = vcombine.high %v366, %v382
        %v434 = vunpack.c.l.s4 1934713408
        %v435 = vunpack.c.0.s8 %v434
        %v436 = vlaneseq
        %v437 = vshrl.u32 %v436, 7
        %v438 = vsub.s32 %v435, %v437
        %v439 = vrot.slane %v431, %v438
        %v441 = vunpack.c.l.s4 1934713408
        %v442 = vunpack.c.0.s8 %v441
        %v443 = vlaneseq
        %v444 = vshrl.u32 %v443, 7
        %v445 = vsub.s32 %v442, %v444
        %v446 = vrot.slane %v432, %v445
        %v447 = vcombine.low %v391, %v407
        %v448 = vcombine.high %v391, %v407
        %v450 = vunpack.c.l.s4 1934713408
        %v451 = vunpack.c.0.s8 %v450
        %v452 = vlaneseq
        %v453 = vshrl.u32 %v452, 7
        %v454 = vsub.s32 %v451, %v453
        %v455 = vrot.slane %v447, %v454
        %v457 = vunpack.c.l.s4 1934713408
        %v458 = vunpack.c.0.s8 %v457
        %v459 = vlaneseq
        %v460 = vshrl.u32 %v459, 7
        %v461 = vsub.s32 %v458, %v460
        %v462 = vrot.slane %v448, %v461
        %v463 = vcombine.low %v398, %v414
        %v464 = vcombine.high %v398, %v414
        %v466 = vunpack.c.l.s4 1934713408
        %v467 = vunpack.c.0.s8 %v466
        %v468 = vlaneseq
        %v469 = vshrl.u32 %v468, 7
        %v470 = vsub.s32 %v467, %v469
        %v471 = vrot.slane %v463, %v470
        %v473 = vunpack.c.l.s4 1934713408
        %v474 = vunpack.c.0.s8 %v473
        %v475 = vlaneseq
        %v476 = vshrl.u32 %v475, 7
        %v477 = vsub.s32 %v474, %v476
        %v478 = vrot.slane %v464, %v477
        %v479 = vcombine.low %v423, %v455
        %v480 = vcombine.high %v423, %v455
        %v481 = vcombine.low %v430, %v462
        %v482 = vcombine.high %v430, %v462
        %v483 = vcombine.low %v439, %v471
        %v484 = vcombine.high %v439, %v471
        %v485 = vcombine.low %v446, %v478
        %v486 = vcombine.high %v446, %v478
        %v487 = vcombine.high %v210, 0.0
        %v489 = vunpack.c.l.s4 1983009808
        %v490 = vunpack.c.0.s8 %v489
        %v491 = vlaneseq
        %v492 = vshrl.u32 %v491, 7
        %v493 = vsub.s32 %v490, %v492
        %v494 = vrot.slane %v210, %v493
        %v496 = vunpack.c.l.s4 1983009808
        %v497 = vunpack.c.0.s8 %v496
        %v498 = vlaneseq
        %v499 = vshrl.u32 %v498, 7
        %v500 = vsub.s32 %v497, %v499
        %v501 = vrot.slane %v487, %v500
        %v502 = vcombine.high %v213, 0.0
        %v504 = vunpack.c.l.s4 1983009808
        %v505 = vunpack.c.0.s8 %v504
        %v506 = vlaneseq
        %v507 = vshrl.u32 %v506, 7
        %v508 = vsub.s32 %v505, %v507
        %v509 = vrot.slane %v213, %v508
        %v511 = vunpack.c.l.s4 1983009808
        %v512 = vunpack.c.0.s8 %v511
        %v513 = vlaneseq
        %v514 = vshrl.u32 %v513, 7
        %v515 = vsub.s32 %v512, %v514
        %v516 = vrot.slane %v502, %v515
        %v517 = vcombine.low %v494, %v509
        %v518 = vcombine.high %v494, %v509
        %v520 = vunpack.c.l.s4 1934713408
        %v521 = vunpack.c.0.s8 %v520
        %v522 = vlaneseq
        %v523 = vshrl.u32 %v522, 7
        %v524 = vsub.s32 %v521, %v523
        %v525 = vrot.slane %v517, %v524
        %v527 = vunpack.c.l.s4 1934713408
        %v528 = vunpack.c.0.s8 %v527
        %v529 = vlaneseq
        %v530 = vshrl.u32 %v529, 7
        %v531 = vsub.s32 %v528, %v530
        %v532 = vrot.slane %v518, %v531
        %v533 = vcombine.low %v501, %v516
        %v534 = vcombine.high %v501, %v516
        %v536 = vunpack.c.l.s4 1934713408
        %v537 = vunpack.c.0.s8 %v536
        %v538 = vlaneseq
        %v539 = vshrl.u32 %v538, 7
        %v540 = vsub.s32 %v537, %v539
        %v541 = vrot.slane %v533, %v540
        %v543 = vunpack.c.l.s4 1934713408
        %v544 = vunpack.c.0.s8 %v543
        %v545 = vlaneseq
        %v546 = vshrl.u32 %v545, 7
        %v547 = vsub.s32 %v544, %v546
        %v548 = vrot.slane %v534, %v547
        %v549 = vcombine.high %v525, 0.0
        %v550 = vcombine.high %v532, 0.0
        %v551 = vcombine.high %v541, 0.0
        %v552 = vcombine.high %v548, 0.0
        %vm577 = vcmask 1046528
        %v578 = vrot.slane %v343, 1
        %v579 = vrot.slane %v479, 1
        %v580 = vsel %vm577, %v578, %v579
        %v581 = vrot.slane %v525, 1
        %v582 = vsel %vm577, %v579, %v581
        %v583 = vrot.slane %v344, 1
        %v584 = vrot.slane %v480, 1
        %v585 = vsel %vm577, %v583, %v584
        %v586 = vrot.slane %v549, 1
        %v587 = vsel %vm577, %v584, %v586
        %v588 = vrot.slane %v345, 1
        %v589 = vrot.slane %v481, 1
        %v590 = vsel %vm577, %v588, %v589
        %v591 = vrot.slane %v532, 1
        %v592 = vsel %vm577, %v589, %v591
        %v593 = vrot.slane %v346, 1
        %v594 = vrot.slane %v482, 1
        %v595 = vsel %vm577, %v593, %v594
        %v596 = vrot.slane %v550, 1
        %v597 = vsel %vm577, %v594, %v596
        %v598 = vrot.slane %v347, 1
        %v599 = vrot.slane %v483, 1
        %v600 = vsel %vm577, %v598, %v599
        %v601 = vrot.slane %v541, 1
        %v602 = vsel %vm577, %v599, %v601
        %v603 = vrot.slane %v348, 1
        %v604 = vrot.slane %v484, 1
        %v605 = vsel %vm577, %v603, %v604
        %v606 = vrot.slane %v551, 1
        %v607 = vsel %vm577, %v604, %v606
        %v608 = vrot.slane %v349, 1
        %v609 = vrot.slane %v485, 1
        %v610 = vsel %vm577, %v608, %v609
        %v611 = vrot.slane %v548, 1
        %v612 = vsel %vm577, %v609, %v611
        %v613 = vrot.slane %v350, 1
        %v614 = vrot.slane %v486, 1
        %v615 = vsel %vm577, %v613, %v614
        %v616 = vrot.slane %v552, 1
        %v617 = vsel %vm577, %v614, %v616
        %618 = vrot.lane.b32.xlu0 %v580, 4
        %v619 = vpop.permute.xlu0 %618
        %620 = vrot.lane.b32.xlu0 %v582, 4
        %v621 = vpop.permute.xlu0 %620
        %622 = vrot.lane.b32.xlu0 %v585, 4
        %v623 = vpop.permute.xlu0 %622
        %624 = vrot.lane.b32.xlu0 %v587, 4
        %v625 = vpop.permute.xlu0 %624
        %626 = vrot.lane.b32.xlu0 %v590, 4
        %v627 = vpop.permute.xlu0 %626
        %628 = vrot.lane.b32.xlu0 %v592, 4
        %v629 = vpop.permute.xlu0 %628
        %630 = vrot.lane.b32.xlu0 %v595, 4
        %v631 = vpop.permute.xlu0 %630
        %632 = vrot.lane.b32.xlu0 %v597, 4
        %v633 = vpop.permute.xlu0 %632
        %634 = vrot.lane.b32.xlu0 %v600, 4
        %v635 = vpop.permute.xlu0 %634
        %636 = vrot.lane.b32.xlu0 %v602, 4
        %v637 = vpop.permute.xlu0 %636
        %638 = vrot.lane.b32.xlu0 %v605, 4
        %v639 = vpop.permute.xlu0 %638
        %640 = vrot.lane.b32.xlu0 %v607, 4
        %v641 = vpop.permute.xlu0 %640
        %642 = vrot.lane.b32.xlu0 %v610, 4
        %v643 = vpop.permute.xlu0 %642
        %644 = vrot.lane.b32.xlu0 %v612, 4
        %v645 = vpop.permute.xlu0 %644
        %646 = vrot.lane.b32.xlu0 %v615, 4
        %v647 = vpop.permute.xlu0 %646
        %648 = vrot.lane.b32.xlu0 %v617, 4
        %v649 = vpop.permute.xlu0 %648
        %vm666 = vcmask 1045504
        %v667 = vrot.slane %v343, 2
        %v668 = vrot.slane %v479, 2
        %v669 = vsel %vm666, %v667, %v668
        %v670 = vrot.slane %v525, 2
        %v671 = vsel %vm666, %v668, %v670
        %v672 = vrot.slane %v344, 2
        %v673 = vrot.slane %v480, 2
        %v674 = vsel %vm666, %v672, %v673
        %v675 = vrot.slane %v549, 2
        %v676 = vsel %vm666, %v673, %v675
        %v677 = vrot.slane %v345, 2
        %v678 = vrot.slane %v481, 2
        %v679 = vsel %vm666, %v677, %v678
        %v680 = vrot.slane %v532, 2
        %v681 = vsel %vm666, %v678, %v680
        %v682 = vrot.slane %v346, 2
        %v683 = vrot.slane %v482, 2
        %v684 = vsel %vm666, %v682, %v683
        %v685 = vrot.slane %v550, 2
        %v686 = vsel %vm666, %v683, %v685
        %v687 = vrot.slane %v347, 2
        %v688 = vrot.slane %v483, 2
        %v689 = vsel %vm666, %v687, %v688
        %v690 = vrot.slane %v541, 2
        %v691 = vsel %vm666, %v688, %v690
        %v692 = vrot.slane %v348, 2
        %v693 = vrot.slane %v484, 2
        %v694 = vsel %vm666, %v692, %v693
        %v695 = vrot.slane %v551, 2
        %v696 = vsel %vm666, %v693, %v695
        %v697 = vrot.slane %v349, 2
        %v698 = vrot.slane %v485, 2
        %v699 = vsel %vm666, %v697, %v698
        %v700 = vrot.slane %v548, 2
        %v701 = vsel %vm666, %v698, %v700
        %v702 = vrot.slane %v350, 2
        %v703 = vrot.slane %v486, 2
        %v704 = vsel %vm666, %v702, %v703
        %v705 = vrot.slane %v552, 2
        %v706 = vsel %vm666, %v703, %v705
        %707 = vrot.lane.b32.xlu0 %v669, 8
        %v708 = vpop.permute.xlu0 %707
        %709 = vrot.lane.b32.xlu0 %v671, 8
        %v710 = vpop.permute.xlu0 %709
        %711 = vrot.lane.b32.xlu0 %v674, 8
        %v712 = vpop.permute.xlu0 %711
        %713 = vrot.lane.b32.xlu0 %v676, 8
        %v714 = vpop.permute.xlu0 %713
        %715 = vrot.lane.b32.xlu0 %v679, 8
        %v716 = vpop.permute.xlu0 %715
        %717 = vrot.lane.b32.xlu0 %v681, 8
        %v718 = vpop.permute.xlu0 %717
        %719 = vrot.lane.b32.xlu0 %v684, 8
        %v720 = vpop.permute.xlu0 %719
        %721 = vrot.lane.b32.xlu0 %v686, 8
        %v722 = vpop.permute.xlu0 %721
        %723 = vrot.lane.b32.xlu0 %v689, 8
        %v724 = vpop.permute.xlu0 %723
        %725 = vrot.lane.b32.xlu0 %v691, 8
        %v726 = vpop.permute.xlu0 %725
        %727 = vrot.lane.b32.xlu0 %v694, 8
        %v728 = vpop.permute.xlu0 %727
        %729 = vrot.lane.b32.xlu0 %v696, 8
        %v730 = vpop.permute.xlu0 %729
        %731 = vrot.lane.b32.xlu0 %v699, 8
        %v732 = vpop.permute.xlu0 %731
        %733 = vrot.lane.b32.xlu0 %v701, 8
        %v734 = vpop.permute.xlu0 %733
        %735 = vrot.lane.b32.xlu0 %v704, 8
        %v736 = vpop.permute.xlu0 %735
        %737 = vrot.lane.b32.xlu0 %v706, 8
        %v738 = vpop.permute.xlu0 %737
        %vm755 = vcmask 31744
        %v756 = vsel %vm755, %v343, %v619
        %v757 = vsel %vm755, %v479, %v621
        %v758 = vsel %vm755, %v344, %v623
        %v759 = vsel %vm755, %v480, %v625
        %v760 = vsel %vm755, %v345, %v627
        %v761 = vsel %vm755, %v481, %v629
        %v762 = vsel %vm755, %v346, %v631
        %v763 = vsel %vm755, %v482, %v633
        %v764 = vsel %vm755, %v347, %v635
        %v765 = vsel %vm755, %v483, %v637
        %v766 = vsel %vm755, %v348, %v639
        %v767 = vsel %vm755, %v484, %v641
        %v768 = vsel %vm755, %v349, %v643
        %v769 = vsel %vm755, %v485, %v645
        %v770 = vsel %vm755, %v350, %v647
        %v771 = vsel %vm755, %v486, %v649
        %vm772 = vcmask 64512
        %v773 = vsel %vm772, %v756, %v708
        %v774 = vsel %vm772, %v757, %v710
        %v775 = vsel %vm772, %v758, %v712
        %v776 = vsel %vm772, %v759, %v714
        %v777 = vsel %vm772, %v760, %v716
        %v778 = vsel %vm772, %v761, %v718
        %v779 = vsel %vm772, %v762, %v720
        %v780 = vsel %vm772, %v763, %v722
        %v781 = vsel %vm772, %v764, %v724
        %v782 = vsel %vm772, %v765, %v726
        %v783 = vsel %vm772, %v766, %v728
        %v784 = vsel %vm772, %v767, %v730
        %v785 = vsel %vm772, %v768, %v732
        %v786 = vsel %vm772, %v769, %v734
        %v787 = vsel %vm772, %v770, %v736
        %v788 = vsel %vm772, %v771, %v738
        %v789 = vld [vmem:[%s1] sm:$0xff]
        %v790 = vld [vmem:[%s1 + $0x8] sm:$0xf]
        %vm791 = vcmask 97280
        %v793 = vsel %vm791, %v773, 0
        %v796 = vsel %vm791, %v774, 0
        %v799 = vsel %vm791, %v775, 0
        %v802 = vsel %vm791, %v776, 0
        %v805 = vsel %vm791, %v777, 0
        %v808 = vsel %vm791, %v778, 0
        %v811 = vsel %vm791, %v779, 0
        %v814 = vsel %vm791, %v780, 0
        %v817 = vsel %vm791, %v781, 0
        %v820 = vsel %vm791, %v782, 0
        %v823 = vsel %vm791, %v783, 0
        %v826 = vsel %vm791, %v784, 0
        %v829 = vsel %vm791, %v785, 0
        %v832 = vsel %vm791, %v786, 0
        %v835 = vsel %vm791, %v787, 0
        %v838 = vsel %vm791, %v788, 0
        %vm840 = vcmask 1043456
        %v842 = vsel %vm840, %v790, 0
        %844 = vmatprep.subr.mxu0 0.0
        %845 = vmatpush1.msra.mxu0 %v789
        %846 = vmatprep.subr.mxu0 0.0
        %847 = vmatpush1.msra.mxu0 %v842
        %848 = vmatprep.subr.mxu0 0.0
        %849 = vmatpush1.msra.mxu0 0.0
        %850 = vmatprep.subr.mxu0 0.0
        %851 = vmatpush1.msra.mxu0 0.0
        %852 = vmatprep.subr.mxu0 0.0
        %853 = vmatpush1.msra.mxu0 0.0
        %854 = vmatprep.subr.mxu0 0.0
        %855 = vmatpush1.msra.mxu0 0.0
        %856 = vmatprep.subr.mxu0 0.0
        %857 = vmatpush1.msra.mxu0 0.0
        %858 = vmatprep.subr.mxu0 0.0
        %859 = vmatpush1.msra.mxu0 0.0
        %860 = vmatprep.subr.mxu0 0.0
        %861 = vmatpush1.msra.mxu0 0.0
        %862 = vmatprep.subr.mxu0 0.0
        %863 = vmatpush1.msra.mxu0 0.0
        %864 = vmatprep.subr.mxu0 0.0
        %865 = vmatpush1.msra.mxu0 0.0
        %866 = vmatprep.subr.mxu0 0.0
        %867 = vmatpush1.msra.mxu0 0.0
        %868 = vmatprep.subr.mxu0 0.0
        %869 = vmatpush1.msra.mxu0 0.0
        %870 = vmatprep.subr.mxu0 0.0
        %871 = vmatpush1.msra.mxu0 0.0
        %872 = vmatprep.subr.mxu0 0.0
        %873 = vmatpush1.msra.mxu0 0.0
        %874 = vmatprep.subr.mxu0 0.0
        %875 = vmatpush1.msra.mxu0 0.0
        %876 = vmatprep.subr.mxu0 0.0
        %877 = vmatpush1.msra.mxu0 0.0
        %878 = vmatprep.subr.mxu0 0.0
        %879 = vmatpush1.msra.mxu0 0.0
        %880 = vmatprep.subr.mxu0 0.0
        %881 = vmatpush1.msra.mxu0 0.0
        %882 = vmatprep.subr.mxu0 0.0
        %883 = vmatpush1.msra.mxu0 0.0
        %884 = vmatprep.subr.mxu0 0.0
        %885 = vmatpush1.msra.mxu0 0.0
        %886 = vmatprep.subr.mxu0 0.0
        %887 = vmatpush1.msra.mxu0 0.0
        %888 = vmatprep.subr.mxu0 0.0
        %889 = vmatpush1.msra.mxu0 0.0
        %890 = vmatprep.subr.mxu0 0.0
        %891 = vmatpush1.msra.mxu0 0.0
        %892 = vmatprep.subr.mxu0 0.0
        %893 = vmatpush1.msra.mxu0 0.0
        %894 = vmatprep.subr.mxu0 0.0
        %895 = vmatpush1.msra.mxu0 0.0
        %896 = vmatprep.subr.mxu0 0.0
        %897 = vmatpush1.msra.mxu0 0.0
        %898 = vmatprep.subr.mxu0 0.0
        %899 = vmatpush1.msra.mxu0 0.0
        %900 = vmatprep.subr.mxu0 0.0
        %901 = vmatpush1.msra.mxu0 0.0
        %902 = vmatprep.subr.mxu0 0.0
        %903 = vmatpush1.msra.mxu0 0.0
        %904 = vmatprep.subr.mxu0 0.0
        %905 = vmatpush1.msra.mxu0 0.0
        %906 = vmatprep.subr.mxu0 0.0
        %907 = vmatpush1.msra.mxu0 0.0
        %908 = vmatprep.mubr.f32.mxu0 0.0
        %909 = vmatmul.mubr.f32.gmra.mrb[0].mxu0 %v793
        %v910 = vpop.f32.mrb[0].mxu0
        %v911 = vadd.f32 0.0, %v910
        %v912 = vpop.f32.mrb[0].mxu0
        %913 = vmatprep.mubr.f32.mxu0 0.0
        %914 = vmatmul.mubr.f32.gmra.mrb[0].mxu0 %v796
        %v915 = vpop.f32.mrb[0].mxu0
        %v916 = vadd.f32 0.0, %v915
        %v917 = vpop.f32.mrb[0].mxu0
        %918 = vmatprep.mubr.f32.mxu0 0.0
        %919 = vmatmul.mubr.f32.gmra.mrb[0].mxu0 %v799
        %v920 = vpop.f32.mrb[0].mxu0
        %v921 = vadd.f32 0.0, %v920
        %v922 = vpop.f32.mrb[0].mxu0
        %923 = vmatprep.mubr.f32.mxu0 0.0
        %924 = vmatmul.mubr.f32.gmra.mrb[0].mxu0 %v802
        %v925 = vpop.f32.mrb[0].mxu0
        %v926 = vadd.f32 0.0, %v925
        %v927 = vpop.f32.mrb[0].mxu0
        %928 = vmatprep.mubr.f32.mxu0 0.0
        %929 = vmatmul.mubr.f32.gmra.mrb[0].mxu0 %v805
        %v930 = vpop.f32.mrb[0].mxu0
        %v931 = vadd.f32 0.0, %v930
        %v932 = vpop.f32.mrb[0].mxu0
        %933 = vmatprep.mubr.f32.mxu0 0.0
        %934 = vmatmul.mubr.f32.gmra.mrb[0].mxu0 %v808
        %v935 = vpop.f32.mrb[0].mxu0
        %v936 = vadd.f32 0.0, %v935
        %v937 = vpop.f32.mrb[0].mxu0
        %938 = vmatprep.mubr.f32.mxu0 0.0
        %939 = vmatmul.mubr.f32.gmra.mrb[0].mxu0 %v811
        %v940 = vpop.f32.mrb[0].mxu0
        %v941 = vadd.f32 0.0, %v940
        %v942 = vpop.f32.mrb[0].mxu0
        %943 = vmatprep.mubr.f32.mxu0 0.0
        %944 = vmatmul.mubr.f32.gmra.mrb[0].mxu0 %v814
        %v945 = vpop.f32.mrb[0].mxu0
        %v946 = vadd.f32 0.0, %v945
        %v947 = vpop.f32.mrb[0].mxu0
        %948 = vmatprep.mubr.f32.mxu0 0.0
        %949 = vmatmul.mubr.f32.gmra.mrb[0].mxu0 %v817
        %v950 = vpop.f32.mrb[0].mxu0
        %v951 = vadd.f32 0.0, %v950
        %v952 = vpop.f32.mrb[0].mxu0
        %953 = vmatprep.mubr.f32.mxu0 0.0
        %954 = vmatmul.mubr.f32.gmra.mrb[0].mxu0 %v820
        %v955 = vpop.f32.mrb[0].mxu0
        %v956 = vadd.f32 0.0, %v955
        %v957 = vpop.f32.mrb[0].mxu0
        %958 = vmatprep.mubr.f32.mxu0 0.0
        %959 = vmatmul.mubr.f32.gmra.mrb[0].mxu0 %v823
        %v960 = vpop.f32.mrb[0].mxu0
        %v961 = vadd.f32 0.0, %v960
        %v962 = vpop.f32.mrb[0].mxu0
        %963 = vmatprep.mubr.f32.mxu0 0.0
        %964 = vmatmul.mubr.f32.gmra.mrb[0].mxu0 %v826
        %v965 = vpop.f32.mrb[0].mxu0
        %v966 = vadd.f32 0.0, %v965
        %v967 = vpop.f32.mrb[0].mxu0
        %968 = vmatprep.mubr.f32.mxu0 0.0
        %969 = vmatmul.mubr.f32.gmra.mrb[0].mxu0 %v829
        %v970 = vpop.f32.mrb[0].mxu0
        %v971 = vadd.f32 0.0, %v970
        %v972 = vpop.f32.mrb[0].mxu0
        %973 = vmatprep.mubr.f32.mxu0 0.0
        %974 = vmatmul.mubr.f32.gmra.mrb[0].mxu0 %v832
        %v975 = vpop.f32.mrb[0].mxu0
        %v976 = vadd.f32 0.0, %v975
        %v977 = vpop.f32.mrb[0].mxu0
        %978 = vmatprep.mubr.f32.mxu0 0.0
        %979 = vmatmul.mubr.f32.gmra.mrb[0].mxu0 %v835
        %v980 = vpop.f32.mrb[0].mxu0
        %v981 = vadd.f32 0.0, %v980
        %v982 = vpop.f32.mrb[0].mxu0
        %983 = vmatprep.mubr.f32.mxu0 0.0
        %984 = vmatmul.mubr.f32.gmra.mrb[0].mxu0 %v838
        %v985 = vpop.f32.mrb[0].mxu0
        %v986 = vadd.f32 0.0, %v985
        %v987 = vpop.f32.mrb[0].mxu0
        %988 = vdwg.mxu0
        %989 = vst.msk [vmem:[%s160] sm:$0xff] %vm772, %v911
        %990 = vst.msk [vmem:[%s160 + $0x8] sm:$0xff] %vm772, %v916
        %991 = vst.msk [vmem:[%s160 + $0x10] sm:$0xff] %vm772, %v921
        %992 = vst.msk [vmem:[%s160 + $0x18] sm:$0xff] %vm772, %v926
        %993 = vst.msk [vmem:[%s160 + $0x20] sm:$0xff] %vm772, %v931
        %994 = vst.msk [vmem:[%s160 + $0x28] sm:$0xff] %vm772, %v936
        %995 = vst.msk [vmem:[%s160 + $0x30] sm:$0xff] %vm772, %v941
        %996 = vst.msk [vmem:[%s160 + $0x38] sm:$0xff] %vm772, %v946
        %997 = vst.msk [vmem:[%s160 + $0x40] sm:$0xff] %vm772, %v951
        %998 = vst.msk [vmem:[%s160 + $0x48] sm:$0xff] %vm772, %v956
        %999 = vst.msk [vmem:[%s160 + $0x50] sm:$0xff] %vm772, %v961
        %1000 = vst.msk [vmem:[%s160 + $0x58] sm:$0xff] %vm772, %v966
        %1001 = vst.msk [vmem:[%s160 + $0x60] sm:$0xff] %vm772, %v971
        %1002 = vst.msk [vmem:[%s160 + $0x68] sm:$0xff] %vm772, %v976
        %1003 = vst.msk [vmem:[%s160 + $0x70] sm:$0xff] %vm772, %v981
        %1004 = vst.msk [vmem:[%s160 + $0x78] sm:$0xff] %vm772, %v986
        %s1005 = smul.u32 16, %s16
        %p1006 = scmp.lt.s32.totalorder %s1005, 63
        %s1007 = scalar_select %p1006, %s1005, 63
        %s1008 = smul.addr %s1007, 8
        %s1009 = scalar_lea.vmem %s2, %s1008
        // Predicated region
        $region33: #{tpu_custom_call.1} parent=27 // pred_check
          %p1010 = pneg %p81
        $region34: #{tpu_custom_call.1} parent=27 // pred_check_branch
          %1012 = sbr.rel (%p1010) target = $region36
        $region35: #{tpu_custom_call.1} parent=27 // pred_region
          %s1013 = smul.u32 16, %s16
        $region36: #{tpu_custom_call.1} parent=27 // pred_fallthru
          _
      $region28: #{tpu_custom_call.1} parent=5 // pred_fallthru
        _
      %p1014 = scmp.le.s32.totalorder 2, %s11
      // Predicated region
      $region37: #{tpu_custom_call.1} parent=5 // pred_check
        %p1015 = pneg %p1014
      $region38: #{tpu_custom_call.1} parent=5 // pred_check_branch
        %1017 = sbr.rel (%p1015) target = $region40
      $region39: #{tpu_custom_call.1} parent=5 // pred_region
        %s1018 = ssub.s32 %s11, 2
        // Predicated region
        $region41: #{tpu_custom_call.1} parent=39 // pred_check
          %p1019 = pneg %p87
        $region42: #{tpu_custom_call.1} parent=39 // pred_check_branch
          %1021 = sbr.rel (%p1019) target = $region44
        $region43: #{tpu_custom_call.1} parent=39 // pred_region
          %s1022 = smul.u32 16, %s17
          %p1023 = scmp.lt.s32.totalorder %s1022, 63
          %s1024 = scalar_select %p1023, %s1022, 63
          %s1025 = smul.addr %s1024, 8
          %s1026 = scalar_lea.vmem %s2, %s1025
        $region44: #{tpu_custom_call.1} parent=39 // pred_fallthru
          _
      $region40: #{tpu_custom_call.1} parent=5 // pred_fallthru
        _
    $region6: #{tpu_custom_call.1} parent=1 // loop_footer
      %s15 = sadd.s32 1, %s11
    $region7: #{tpu_custom_call.1} parent=1 // loop_footer_branch
      %10 = sbr.rel target = $region3
    $region8: #{tpu_custom_call.1} parent=1 // loop_exit
      _
    %1027 = vsyncpa [#allocation3], 1
    %s1028 = scalar_lea.sflag [#allocation3], 1
    %1029 = vsyncpa %s1028, 1

</llo_original>
